<compile_context>
chip_gen: v5e
topology: v5e:2x2
jax: 0.10.0
libtpu: 0.0.40
codegen_flags: <defaults>
</compile_context>

<pallas_src>
import functools

import jax
import jax.numpy as jnp
from jax.experimental import pallas as pl
from jax.experimental.pallas import tpu as pltpu

LIF_TAU = 2.0
LIF_V_TH = 1.0
BN_EPS = 0.001

_X_DTYPE = jnp.bfloat16
_X_ITEMSIZE = 2


def _focus_conv_bn_lif_kernel(w_ref, thr_ref, x_ref, o_ref):
    """Fused folded-BN 1x1 conv (matmul) + LIF spike for one pixel tile.

    w_ref:   (Cout, K)   bf16 BN-scale-folded 1x1 conv weight (VMEM resident)
    thr_ref: (Cout, 1)   f32 per-channel threshold = tau*v_th - bn_bias
    x_ref:   (K, TM)     bf16 focused input tile (channels on sublane,
                         pixels on lane) — batch dim squeezed away
    o_ref:   (Cout, TM)  binary spikes (0/1) in out_dtype
    """
    acc = jnp.dot(w_ref[...], x_ref[...],
                  preferred_element_type=jnp.float32)        # (Cout, TM) f32
    o_ref[...] = (acc >= thr_ref[...]).astype(o_ref.dtype)


def _pick_tile_m(m_total, n_batch, target=8192):
    """Pick the pixel-tile width TM.

    * Multiple of 128 (lane-dense, unmasked stores) whenever m_total >= 128.
    * Prefers the largest 128-multiple <= target that divides m_total exactly;
      otherwise uses a capped TM with a cdiv grid (masked tail on last step) —
      never an unbounded full-M tile that could blow past VMEM on v7x.
    * Shrinks TM when batch == 1 so there are >= 2 parallel grid steps and
      both v7x TensorCores get work.
    """
    if m_total <= 128:
        return m_total                       # full-extent block is legal
    cap = min(target, (m_total // 128) * 128)
    tm = cap
    for cand in range(cap, 127, -128):
        if m_total % cand == 0:
            tm = cand
            break
    while n_batch == 1 and pl.cdiv(m_total, tm) < 2 and tm > 128:
        tm = max(128, ((tm // 2) + 127) // 128 * 128)
    return tm


@functools.partial(jax.jit, static_argnames=("out_channels", "out_dtype"))
def focus_snn_forward(x_nchw, w_oi, gamma, beta, run_mean, run_var,
                      out_channels, out_dtype=jnp.int8):
    """FocusSNN forward.

    x_nchw: (N, C, H, W) float32.
    w_oi:   (Cout, 4*C) or (Cout, 4*C, 1, 1) 1x1 conv weight.
    Returns (N, Cout, H/2, W/2) spikes (0/1) in `out_dtype`.  Default int8
    (spike values are still exactly 0/1); pass out_dtype=jnp.float32 for
    dtype parity with the PyTorch module at 4x the output HBM traffic.
    """
    n, c, h, w = x_nchw.shape
    h2, w2 = h // 2, w // 2
    k = 4 * c
    m_per = h2 * w2

    if w_oi.ndim == 4:                       # raw PyTorch (Cout, 4C, 1, 1)
        w_oi = w_oi.reshape(out_channels, k)

    # --- Focus (space-to-depth) + bf16 downcast in ONE fused transpose:
    #     (N,C,H,W) -> (N,C,H2,hp,W2,wp) -> (N, wp,hp,C, H2,W2) -> (N, 4C, M)
    # K order is g*C + c with g = 2*wp + hp, matching torch.cat([tl,bl,tr,br]).
    x6 = x_nchw.reshape(n, c, h2, 2, w2, 2).astype(_X_DTYPE)
    x_km = jnp.transpose(x6, (0, 5, 3, 1, 2, 4)).reshape(n, k, m_per)

    # --- Fold BatchNorm (inference stats) into weight & per-channel threshold.
    scale = gamma / jnp.sqrt(run_var + BN_EPS)                # (Cout,)
    bias = beta - run_mean * scale                            # (Cout,)
    w_folded = (w_oi * scale[:, None]).astype(_X_DTYPE)       # (Cout, K) bf16
    thr = (LIF_TAU * LIF_V_TH - bias).reshape(out_channels, 1).astype(jnp.float32)

    tm = _pick_tile_m(m_per, n)
    grid = (n, pl.cdiv(m_per, tm))
    out_itemsize = jnp.dtype(out_dtype).itemsize

    # Per-step footprint (double buffered x + out tiles) + resident W / thr.
    per_step = tm * (k * _X_ITEMSIZE + out_channels * out_itemsize)
    resident = out_channels * (k * _X_ITEMSIZE + 4)
    vmem_limit = int(min(48 * 2 ** 20,
                         max(32 * 2 ** 20, 3 * per_step + resident + (2 << 20))))

    out = pl.pallas_call(
        _focus_conv_bn_lif_kernel,
        out_shape=jax.ShapeDtypeStruct((n, out_channels, m_per), out_dtype),
        grid=grid,
        in_specs=[
            pl.BlockSpec((out_channels, k), lambda b, j: (0, 0)),     # resident W
            pl.BlockSpec((out_channels, 1), lambda b, j: (0, 0)),     # resident thr
            pl.BlockSpec((pl.Squeezed(), k, tm), lambda b, j: (b, 0, j)),
        ],
        out_specs=pl.BlockSpec((pl.Squeezed(), out_channels, tm),
                               lambda b, j: (b, 0, j)),
        compiler_params=pltpu.CompilerParams(
            dimension_semantics=("parallel", "parallel"),
            vmem_limit_bytes=vmem_limit),
        cost_estimate=pl.CostEstimate(
            flops=2 * n * m_per * k * out_channels,
            transcendentals=0,
            bytes_accessed=(n * m_per * k * _X_ITEMSIZE
                            + out_channels * k * _X_ITEMSIZE + out_channels * 4
                            + n * m_per * out_channels * out_itemsize)),
    )(w_folded, thr, x_km)

    # (N, Cout, H2*W2) -> (N, Cout, H2, W2): pure reshape, no transpose needed.
    return out.reshape(n, out_channels, h2, w2)


def _reference_forward(x_nchw, w_oi, gamma, beta, run_mean, run_var):
    """Pure-JAX f32 reference matching the PyTorch module semantics.

    Returns (spikes, pre_activation) where spike = (pre_activation/tau >= v_th).
    """
    tl = x_nchw[..., ::2, ::2]
    bl = x_nchw[..., 1::2, ::2]
    tr = x_nchw[..., ::2, 1::2]
    br = x_nchw[..., 1::2, 1::2]
    xf = jnp.concatenate((tl, bl, tr, br), axis=1)
    y = jnp.einsum("nkhw,ok->nohw", xf, w_oi)
    scale = gamma / jnp.sqrt(run_var + BN_EPS)
    y = (y * scale[None, :, None, None]
         + (beta - run_mean * scale)[None, :, None, None])
    spikes = ((y / LIF_TAU) >= LIF_V_TH).astype(jnp.float32)
    return spikes, y


if __name__ == "__main__":
    # FocusSNN(in_channels=4, out_channels=32, ksize=1, stride=1, act='spiking')
    batch, in_channels, spatial = 2, 4, 16
    out_channels = 32
    k = 4 * in_channels

    key = jax.random.PRNGKey(0)
    k_x, k_w, k_g, k_b, k_m, k_v = jax.random.split(key, 6)

    x = jax.random.normal(k_x, (batch, in_channels, spatial, spatial), jnp.float32)
    # conv weight: (Cout, 4*Cin, 1, 1) -> pre-squeezed to (Cout, 4*Cin)
    w = jax.random.normal(k_w, (out_channels, k), jnp.float32) * 0.5
    gamma = jax.random.uniform(k_g, (out_channels,), jnp.float32, 0.5, 1.5)
    beta = jax.random.normal(k_b, (out_channels,), jnp.float32) * 0.1
    run_mean = jax.random.normal(k_m, (out_channels,), jnp.float32) * 0.1
    run_var = jax.random.uniform(k_v, (out_channels,), jnp.float32, 0.5, 1.5)

    ref_spk, ref_pre = _reference_forward(x, w, gamma, beta, run_mean, run_var)
    # bf16 operands may legitimately flip spikes only when the f32
    # pre-activation lands in a narrow band around the firing threshold.
    near_thr = jnp.abs(ref_pre - LIF_TAU * LIF_V_TH) <= 0.15

    for dtype in (jnp.int8, jnp.float32):
        out = focus_snn_forward(x, w, gamma, beta, run_mean, run_var,
                                out_channels=out_channels, out_dtype=dtype)
        out = jax.block_until_ready(out)
        assert out.shape == (batch, out_channels, spatial // 2, spatial // 2), out.shape
        outf = out.astype(jnp.float32)
        assert bool(jnp.all((outf == 0.0) | (outf == 1.0))), "non-binary spikes"
        mism = outf != ref_spk
        assert not bool(jnp.any(jnp.logical_and(mism, jnp.logical_not(near_thr)))), (
            f"off-threshold spike mismatch for out_dtype={dtype}")
        frac = float(jnp.mean(mism))
        assert frac < 0.02, f"mismatch fraction {frac} for out_dtype={dtype}"

    print("KERNEL_OK")
</pallas_src>

<mosaic_0001>
module attributes {stable_mosaic.version = 11 : i64} {
  func.func @_focus_conv_bn_lif_kernel(%arg0: i32, %arg1: i32, %arg2: memref<32x16xbf16, #tpu.memory_space<vmem>>, %arg3: memref<32x1xf32, #tpu.memory_space<vmem>>, %arg4: memref<1x16x64xbf16, #tpu.memory_space<vmem>>, %arg5: memref<1x32x64xi8, #tpu.memory_space<vmem>>) attributes {dimension_semantics = [#tpu.dimension_semantics<parallel>, #tpu.dimension_semantics<parallel>], iteration_bounds = array<i64: 2, 1>, scalar_prefetch = 0 : i64, scratch_operands = 0 : i64, tpu.core_type = #tpu.core_type<tc>, window_params = [{pipeline_mode = #tpu.pipeline_mode<synchronous>, transform_indices = @transform_0, window_bounds = array<i64: 32, 16>}, {pipeline_mode = #tpu.pipeline_mode<synchronous>, transform_indices = @transform_1, window_bounds = array<i64: 32, 1>}, {transform_indices = @transform_2, window_bounds = array<i64: 1, 16, 64>}, {transform_indices = @transform_3, window_bounds = array<i64: 1, 32, 64>}]} {
    %c0 = arith.constant 0 : index
    %c0_0 = arith.constant 0 : index
    %0 = vector.load %arg2[%c0, %c0_0] : memref<32x16xbf16, #tpu.memory_space<vmem>>, vector<32x16xbf16>
    %c0_1 = arith.constant 0 : index
    %c0_2 = arith.constant 0 : index
    %c0_3 = arith.constant 0 : index
    %1 = vector.load %arg4[%c0_1, %c0_2, %c0_3] : memref<1x16x64xbf16, #tpu.memory_space<vmem>>, vector<1x16x64xbf16>
    %2 = vector.shape_cast %1 : vector<1x16x64xbf16> to vector<16x64xbf16>
    %cst = arith.constant dense<0.000000e+00> : vector<32x64xf32>
    %3 = tpu.matmul %0, %2, %cst {dimension_numbers = #tpu.dot_dimension_numbers<[1], [0], [0], [1], [0, 0, 1, 1], [], []>} : vector<32x16xbf16>, vector<16x64xbf16>, vector<32x64xf32> -> vector<32x64xf32>
    %c0_4 = arith.constant 0 : index
    %c0_5 = arith.constant 0 : index
    %4 = vector.load %arg3[%c0_4, %c0_5] : memref<32x1xf32, #tpu.memory_space<vmem>>, vector<32x1xf32>
    %5 = vector.broadcast %4 : vector<32x1xf32> to vector<32x64xf32>
    %6 = arith.cmpf oge, %3, %5 : vector<32x64xf32>
    %7 = arith.extui %6 : vector<32x64xi1> to vector<32x64xi8>
    %c0_6 = arith.constant 0 : index
    %c0_7 = arith.constant 0 : index
    %c0_8 = arith.constant 0 : index
    %8 = vector.load %arg5[%c0_6, %c0_7, %c0_8] : memref<1x32x64xi8, #tpu.memory_space<vmem>>, vector<1x32x64xi8>
    %9 = vector.shape_cast %8 : vector<1x32x64xi8> to vector<32x64xi8>
    %10 = vector.shape_cast %7 : vector<32x64xi8> to vector<1x32x64xi8>
    tpu.vector_store %arg5[%c0_6, %c0_7, %c0_8], %10 {strides = array<i32>} : memref<1x32x64xi8, #tpu.memory_space<vmem>>, vector<1x32x64xi8>,
    return
  }
  func.func @transform_0(%arg0: i32, %arg1: i32) -> (i32, i32) {
    %c0_i32 = arith.constant 0 : i32
    %c0_i32_0 = arith.constant 0 : i32
    %c0_i32_1 = arith.constant 0 : i32
    return %c0_i32, %c0_i32_0 : i32, i32
  }
  func.func @transform_1(%arg0: i32, %arg1: i32) -> (i32, i32) {
    %c0_i32 = arith.constant 0 : i32
    %c0_i32_0 = arith.constant 0 : i32
    %c0_i32_1 = arith.constant 0 : i32
    return %c0_i32, %c0_i32_0 : i32, i32
  }
  func.func @transform_2(%arg0: i32, %arg1: i32) -> (i32, i32, i32) {
    %c0_i32 = arith.constant 0 : i32
    %c0_i32_0 = arith.constant 0 : i32
    return %arg0, %c0_i32, %arg1 : i32, i32, i32
  }
  func.func @transform_3(%arg0: i32, %arg1: i32) -> (i32, i32, i32) {
    %c0_i32 = arith.constant 0 : i32
    %c0_i32_0 = arith.constant 0 : i32
    return %arg0, %c0_i32, %arg1 : i32, i32, i32
  }
}

</mosaic_0001>

<llo_original>
// kernel: focus_snn_forward.1
$region0: #{focus_snn_forward.1}
  #allocation0 [shape = 'u32[]', space=smem, size = 0x4, offset = 0x4, fixed_abs, tag = 'smem constant byte address 0x4 - core index']
  #allocation1 [shape = 'u32[72,128]{1,0:T(1,128)}', space=vmem, size = 0x9000, scoped, tag = 'internal scratch']
  %s0 = inlined_call_operand.vmem [shape: bf16[32,16], index: 0, kind: input, shape index: {}]
  %s1 = inlined_call_operand.vmem [shape: f32[32,1], index: 1, kind: input, shape index: {}]
  %s2 = inlined_call_operand.vmem [shape: bf16[2,16,64], index: 2, kind: input, shape index: {}]
  %s3 = inlined_call_operand.vmem [shape: s8[2,32,64], index: 3, kind: output, shape index: {}]
  %s4 = sld [smem:[#allocation0]]
  $region45: #{focus_snn_forward.1} parent=0
    _
  %s6 = ssub.s32 1, %s4
  %s7 = scalar_select 0, %s6, %s4
  loop: start=0, step=1, limit=4
  $region2: #{focus_snn_forward.1} parent=0 // loop_pre_header
    _
  $region3: #{focus_snn_forward.1} parent=0 // loop_header
    %s9 = sphi 0, %s13
    %p10 = scmp.ge.s32.totalorder %s9, 4
    %s16 = sphi 0, %s28
    %s17 = sphi 0, %s24
    %s18 = sphi 0, %s16
    %s19 = sphi 0, %s17
    %s20 = sphi 0, %s18
    %s21 = sphi 0, %s19
    %s29 = sphi 0, %s29
    %s31 = sphi 0, %s29
    %s32 = sphi 0, %s31
    %s46 = sphi 0, %s32
    %s50 = sphi 0, %s50
    %s52 = sphi 0, %s50
    %s53 = sphi 0, %s52
    %s67 = sphi 0, %s53
    %s75 = sphi 0, %s77
    %s78 = sphi 0, %s75
    %s79 = sphi 0, %s78
    %s95 = sphi 0, %s79
    %s103 = sphi 0, %s105
    %s106 = sphi 0, %s103
    %s107 = sphi 0, %s106
    %s123 = sphi 0, %s107
  $region4: #{focus_snn_forward.1} parent=0 // loop_header_branch
    %12 = sbr.rel (%p10) target = $region8
  $region5: #{focus_snn_forward.1} parent=0 // loop_body
    %s14 = ssub.s32 %s9, 1
    %s15 = ssub.s32 %s9, 2
    %s22 = sadd.s32 1, %s17
    %p23 = scmp.ge.s32.totalorder %s22, 1
    %s24 = scalar_select %p23, 0, %s22
    %s25 = sadd.s32 1, %s16
    %s26 = scalar_select %p23, %s25, %s16
    %p27 = scmp.ge.s32.totalorder %s26, 2
    %s28 = scalar_select %p27, 0, %s26
    %s30 = sadd.s32 %s29, 1
    %p33 = scmp.eq.s32.totalorder %s9, 1
    %p34 = scmp.ne.s32.totalorder %s29, %s31
    %p35 = scmp.eq.s32.totalorder %s9, 0
    %p36 = por %p34, %p35
    %p37 = scmp.ne.s32.totalorder %s29, %s31
    %p38 = scmp.eq.s32.totalorder %s14, 1
    %p39 = por %p37, %p38
    %p40 = scmp.ne.s32.totalorder %s31, %s32
    %p41 = scmp.eq.s32.totalorder %s14, 0
    %p42 = por %p40, %p41
    %p43 = scmp.ne.s32.totalorder %s31, %s32
    %p44 = scmp.eq.s32.totalorder %s15, 1
    %p45 = por %p43, %p44
    %p47 = scmp.ne.s32.totalorder %s32, %s46
    %p48 = scmp.eq.s32.totalorder %s15, 0
    %p49 = por %p47, %p48
    %s51 = sadd.s32 %s50, 1
    %p54 = scmp.eq.s32.totalorder %s9, 1
    %p55 = scmp.ne.s32.totalorder %s50, %s52
    %p56 = scmp.eq.s32.totalorder %s9, 0
    %p57 = por %p55, %p56
    %p58 = scmp.ne.s32.totalorder %s50, %s52
    %p59 = scmp.eq.s32.totalorder %s14, 1
    %p60 = por %p58, %p59
    %p61 = scmp.ne.s32.totalorder %s52, %s53
    %p62 = scmp.eq.s32.totalorder %s14, 0
    %p63 = por %p61, %p62
    %p64 = scmp.ne.s32.totalorder %s52, %s53
    %p65 = scmp.eq.s32.totalorder %s15, 1
    %p66 = por %p64, %p65
    %p68 = scmp.ne.s32.totalorder %s53, %s67
    %p69 = scmp.eq.s32.totalorder %s15, 0
    %p70 = por %p68, %p69
    %s71 = ssub.s32 %s16, %s28
    %s72 = ssub.s32 %s17, %s24
    %s73 = sor.u32 %s71, %s72
    %p74 = scmp.eq.s32.totalorder %s73, 0
    %s76 = sadd.s32 %s75, 1
    %s77 = scalar_select %p74, %s75, %s76
    %p80 = pneg %p74
    %p81 = scmp.eq.s32.totalorder %s9, 1
    %p82 = por %p80, %p81
    %p83 = scmp.ne.s32.totalorder %s75, %s78
    %p84 = scmp.eq.s32.totalorder %s9, 0
    %p85 = por %p83, %p84
    %p86 = scmp.ne.s32.totalorder %s75, %s78
    %p87 = scmp.eq.s32.totalorder %s14, 1
    %p88 = por %p86, %p87
    %p89 = scmp.ne.s32.totalorder %s78, %s79
    %p90 = scmp.eq.s32.totalorder %s14, 0
    %p91 = por %p89, %p90
    %p92 = scmp.ne.s32.totalorder %s78, %s79
    %p93 = scmp.eq.s32.totalorder %s15, 1
    %p94 = por %p92, %p93
    %p96 = scmp.ne.s32.totalorder %s79, %s95
    %p97 = scmp.eq.s32.totalorder %s15, 0
    %p98 = por %p96, %p97
    %s99 = ssub.s32 %s16, %s28
    %s100 = ssub.s32 %s17, %s24
    %s101 = sor.u32 %s99, %s100
    %p102 = scmp.eq.s32.totalorder %s101, 0
    %s104 = sadd.s32 %s103, 1
    %s105 = scalar_select %p102, %s103, %s104
    %p108 = pneg %p102
    %p109 = scmp.eq.s32.totalorder %s9, 1
    %p110 = por %p108, %p109
    %p111 = scmp.ne.s32.totalorder %s103, %s106
    %p112 = scmp.eq.s32.totalorder %s9, 0
    %p113 = por %p111, %p112
    %p114 = scmp.ne.s32.totalorder %s103, %s106
    %p115 = scmp.eq.s32.totalorder %s14, 1
    %p116 = por %p114, %p115
    %p117 = scmp.ne.s32.totalorder %s106, %s107
    %p118 = scmp.eq.s32.totalorder %s14, 0
    %p119 = por %p117, %p118
    %p120 = scmp.ne.s32.totalorder %s106, %s107
    %p121 = scmp.eq.s32.totalorder %s15, 1
    %p122 = por %p120, %p121
    %p124 = scmp.ne.s32.totalorder %s107, %s123
    %p125 = scmp.eq.s32.totalorder %s15, 0
    %p126 = por %p124, %p125
    %p127 = scmp.le.s32.totalorder 1, %s9
    %p128 = scmp.lt.s32.totalorder %s9, 3
    %p129 = pnand %p127, %p128
    %p130 = pneg %p129
    // Predicated region
    $region9: #{focus_snn_forward.1} parent=5 // pred_check
      _
    $region10: #{focus_snn_forward.1} parent=5 // pred_check_branch
      %132 = sbr.rel (%p129) target = $region12
    $region11: #{focus_snn_forward.1} parent=5 // pred_region
      %s133 = ssub.s32 %s9, 1
      // Predicated region
      $region13: #{focus_snn_forward.1} parent=11 // pred_check
        %p134 = pneg %p42
      $region14: #{focus_snn_forward.1} parent=11 // pred_check_branch
        %136 = sbr.rel (%p134) target = $region16
      $region15: #{focus_snn_forward.1} parent=11 // pred_region
        _
      $region16: #{focus_snn_forward.1} parent=11 // pred_fallthru
        _
      // Predicated region
      $region17: #{focus_snn_forward.1} parent=11 // pred_check
        %p137 = pneg %p63
      $region18: #{focus_snn_forward.1} parent=11 // pred_check_branch
        %139 = sbr.rel (%p137) target = $region20
      $region19: #{focus_snn_forward.1} parent=11 // pred_region
        _
      $region20: #{focus_snn_forward.1} parent=11 // pred_fallthru
        _
    $region12: #{focus_snn_forward.1} parent=5 // pred_fallthru
      _
    %p140 = scmp.lt.s32.totalorder %s9, 2
    // Predicated region
    $region21: #{focus_snn_forward.1} parent=5 // pred_check
      %p141 = pneg %p140
    $region22: #{focus_snn_forward.1} parent=5 // pred_check_branch
      %143 = sbr.rel (%p141) target = $region24
    $region23: #{focus_snn_forward.1} parent=5 // pred_region
      // Predicated region
      $region25: #{focus_snn_forward.1} parent=23 // pred_check
        %p144 = pneg %p85
      $region26: #{focus_snn_forward.1} parent=23 // pred_check_branch
        %146 = sbr.rel (%p144) target = $region28
      $region27: #{focus_snn_forward.1} parent=23 // pred_region
        %p147 = scmp.lt.s32.totalorder %s16, 1
        %s148 = scalar_select %p147, %s16, 1
        %p149 = scmp.lt.s32.totalorder %s17, 0
        %s150 = scalar_select %p149, %s17, 0
        %s151 = smul.addr %s148, 2
        %s152 = sadd.s32 %s150, %s151
        %s153 = smul.addr %s152, 4
        %s154 = scalar_lea.vmem %s2, %s153
      $region28: #{focus_snn_forward.1} parent=23 // pred_fallthru
        _
    $region24: #{focus_snn_forward.1} parent=5 // pred_fallthru
      _
    %p155 = scmp.le.s32.totalorder 1, %s9
    %p156 = scmp.lt.s32.totalorder %s9, 3
    %p157 = pnand %p155, %p156
    %p158 = pneg %p157
    // Predicated region
    $region29: #{focus_snn_forward.1} parent=5 // pred_check
      _
    $region30: #{focus_snn_forward.1} parent=5 // pred_check_branch
      %160 = sbr.rel (%p157) target = $region32
    $region31: #{focus_snn_forward.1} parent=5 // pred_region
      %s161 = ssub.s32 %s9, 1
      %p162 = pneg %p42
      %p163 = pneg %p39
      %p164 = pneg %p63
      %p165 = pneg %p60
      %p166 = scmp.lt.s32.totalorder %s18, 1
      %s167 = scalar_select %p166, %s18, 1
      %p168 = scmp.lt.s32.totalorder %s19, 0
      %s169 = scalar_select %p168, %s19, 0
      %s170 = smul.addr %s167, 2
      %s171 = sadd.s32 %s169, %s170
      %s172 = smul.addr %s171, 4
      %s173 = scalar_lea.vmem %s2, %s172
      %p174 = pneg %p91
      %p175 = pneg %p88
      %p176 = pneg %p119
      %p177 = pneg %p116
      %p178 = scmp.lt.s32.totalorder %s18, 1
      %s179 = scalar_select %p178, %s18, 1
      %p180 = scmp.lt.s32.totalorder %s19, 0
      %s181 = scalar_select %p180, %s19, 0
      %s182 = smul.addr %s179, 4
      %s183 = sadd.s32 %s181, %s182
      %s184 = smul.addr %s183, 2
      %s185 = scalar_lea.vmem %s3, %s184
      %p186 = scmp.lt.s32.totalorder %s18, 1
      %s187 = scalar_select %p186, %s18, 1
      %p188 = scmp.lt.s32.totalorder %s19, 0
      %s189 = scalar_select %p188, %s19, 0
      %s190 = smul.addr %s187, 2
      %s191 = sadd.s32 %s189, %s190
      %s192 = smul.addr %s191, 4
      %s193 = scalar_lea.vmem %s2, %s192
      %p194 = scmp.lt.s32.totalorder %s18, 1
      %s195 = scalar_select %p194, %s18, 1
      %p196 = scmp.lt.s32.totalorder %s19, 0
      %s197 = scalar_select %p196, %s19, 0
      %s198 = smul.addr %s195, 4
      %s199 = sadd.s32 %s197, %s198
      %s200 = smul.addr %s199, 2
      %s201 = scalar_lea.vmem %s3, %s200
      %v205 = vld [vmem:[%s0] sm:$0xf]
      %v206 = vld [vmem:[%s0 + $0x4] sm:$0xf]
      %v207 = vld [vmem:[%s0 + $0x8] sm:$0xf]
      %v208 = vld [vmem:[%s0 + $0xc] sm:$0xf]
      %v209 = vld [vmem:[%s193] sm:$0xf]
      %v210 = vld [vmem:[%s193 + $0x4] sm:$0xf]
      %v215 = vunpack.c.l.b16 %v205
      %v216 = vunpack.c.l.b16 %v206
      %v217 = vunpack.c.l.b16 %v207
      %v218 = vunpack.c.l.b16 %v208
      %v219 = vpack.c.b16 %v216, %v215
      %v220 = vpack.c.b16 %v218, %v217
      %v223 = vunpack.c.l.b16 %v209
      %v224 = vunpack.c.l.b16 %v210
      %v225 = vpack.c.b16 %v224, %v223
      %vm227 = vcmask 130048
      %v229 = vsel %vm227, %v219, 0
      %v232 = vsel %vm227, %v220, 0
      %234 = vmatpush.bf16.msra.mxu0 0
      %235 = vmatpush.bf16.msra.mxu0 0
      %236 = vmatpush.bf16.msra.mxu0 0
      %237 = vmatpush.bf16.msra.mxu0 0
      %238 = vmatpush.bf16.msra.mxu0 0
      %239 = vmatpush.bf16.msra.mxu0 0
      %240 = vmatpush.bf16.msra.mxu0 0
      %241 = vmatpush.bf16.msra.mxu0 %v225
      %242 = vmatmul.bf16.gmra.mxu0 %v229
      %v243 = vpop.f32.mrf.mxu0
      %v244 = vadd.f32 0.0, %v243
      %v245 = vpop.f32.mrf.mxu0
      %v246 = vadd.f32 0.0, %v245
      %247 = vmatmul.bf16.gmra.mxu0 %v232
      %v248 = vpop.f32.mrf.mxu0
      %v249 = vadd.f32 0.0, %v248
      %v250 = vpop.f32.mrf.mxu0
      %v251 = vadd.f32 0.0, %v250
      %252 = vdwg.mxu0
      %v253 = vld [vmem:[%s1] sm:$0xff]
      %v254 = vld [vmem:[%s1 + $0x8] sm:$0xff]
      %v255 = vld [vmem:[%s1 + $0x10] sm:$0xff]
      %v256 = vld [vmem:[%s1 + $0x18] sm:$0xff]
      %258 = vset.pattern.permute.xlu0 0
      %259 = vperm.xlu0 %258, %v253
      %v260 = vpop.permute.xlu0 %259
      %263 = vset.pattern.permute.xlu0 0
      %264 = vperm.xlu0 %263, %v254
      %v265 = vpop.permute.xlu0 %264
      %268 = vset.pattern.permute.xlu0 0
      %269 = vperm.xlu0 %268, %v255
      %v270 = vpop.permute.xlu0 %269
      %273 = vset.pattern.permute.xlu0 0
      %274 = vperm.xlu0 %273, %v256
      %v275 = vpop.permute.xlu0 %274
      %vm277 = vcmp.ge.f32.partialorder %v244, %v260
      %vm278 = vcmp.ge.f32.partialorder %v246, %v265
      %vm279 = vcmp.ge.f32.partialorder %v249, %v270
      %vm280 = vcmp.ge.f32.partialorder %v251, %v275
      %vm281 = vmpackc.low %vm278, %vm277
      %vm282 = vmpackc.low %vm280, %vm279
      %v283 = vsel %vm281, 16711935, 0
      %v284 = vsel %vm282, 16711935, 0
      %v285 = vpack.c.b8 %v284, %v283
      %vm286 = vnez %v285
      %v287 = vsel %vm286, 16843009, 0
      %v288 = vunpack.c.0.s8 %v287
      %v289 = vunpack.c.1.s8 %v287
      %v290 = vunpack.c.2.s8 %v287
      %v291 = vunpack.c.3.s8 %v287
      %v292 = vpack.c.b16 %v288, %v288
      %v293 = vpack.c.b8 %v292, %v292
      %v294 = vpack.c.b16 %v289, %v289
      %v295 = vpack.c.b8 %v294, %v294
      %v296 = vpack.c.b16 %v290, %v290
      %v297 = vpack.c.b8 %v296, %v296
      %v298 = vpack.c.b16 %v291, %v291
      %v299 = vpack.c.b8 %v298, %v298
      %vm300 = vcmask 517120
      %301 = vst.msk [vmem:[%s201] sm:$0x3] %vm300, %v293
      %302 = vst.msk [vmem:[%s201 + $0x2] sm:$0x3] %vm300, %v295
      %303 = vst.msk [vmem:[%s201 + $0x4] sm:$0x3] %vm300, %v297
      %304 = vst.msk [vmem:[%s201 + $0x6] sm:$0x3] %vm300, %v299
      %p305 = scmp.lt.s32.totalorder %s18, 1
      %s306 = scalar_select %p305, %s18, 1
      %p307 = scmp.lt.s32.totalorder %s19, 0
      %s308 = scalar_select %p307, %s19, 0
      %s309 = smul.addr %s306, 4
      %s310 = sadd.s32 %s308, %s309
      %s311 = smul.addr %s310, 2
      %s312 = scalar_lea.vmem %s3, %s311
      // Predicated region
      $region33: #{focus_snn_forward.1} parent=31 // pred_check
        %p313 = pneg %p116
      $region34: #{focus_snn_forward.1} parent=31 // pred_check_branch
        %315 = sbr.rel (%p313) target = $region36
      $region35: #{focus_snn_forward.1} parent=31 // pred_region
        _
      $region36: #{focus_snn_forward.1} parent=31 // pred_fallthru
        _
    $region32: #{focus_snn_forward.1} parent=5 // pred_fallthru
      _
    %p316 = scmp.le.s32.totalorder 2, %s9
    // Predicated region
    $region37: #{focus_snn_forward.1} parent=5 // pred_check
      %p317 = pneg %p316
    $region38: #{focus_snn_forward.1} parent=5 // pred_check_branch
      %319 = sbr.rel (%p317) target = $region40
    $region39: #{focus_snn_forward.1} parent=5 // pred_region
      %s320 = ssub.s32 %s9, 2
      // Predicated region
      $region41: #{focus_snn_forward.1} parent=39 // pred_check
        %p321 = pneg %p122
      $region42: #{focus_snn_forward.1} parent=39 // pred_check_branch
        %323 = sbr.rel (%p321) target = $region44
      $region43: #{focus_snn_forward.1} parent=39 // pred_region
        %p324 = scmp.lt.s32.totalorder %s20, 1
        %s325 = scalar_select %p324, %s20, 1
        %p326 = scmp.lt.s32.totalorder %s21, 0
        %s327 = scalar_select %p326, %s21, 0
        %s328 = smul.addr %s325, 4
        %s329 = sadd.s32 %s327, %s328
        %s330 = smul.addr %s329, 2
        %s331 = scalar_lea.vmem %s3, %s330
      $region44: #{focus_snn_forward.1} parent=39 // pred_fallthru
        _
    $region40: #{focus_snn_forward.1} parent=5 // pred_fallthru
      _
  $region6: #{focus_snn_forward.1} parent=0 // loop_footer
    %s13 = sadd.s32 1, %s9
  $region7: #{focus_snn_forward.1} parent=0 // loop_footer_branch
    %8 = sbr.rel target = $region3
  $region8: #{focus_snn_forward.1} parent=0 // loop_exit
    _

</llo_original>
